<compile_context>
chip_gen: v5e
topology: v5e:2x2
jax: 0.10.0
libtpu: 0.0.40
codegen_flags: <defaults>
</compile_context>

<pallas_src>
import functools

import jax
import jax.numpy as jnp
from jax.experimental import pallas as pl
from jax.experimental.pallas import tpu as pltpu

_LANES = 128
_OUT_SUBLANES = 8  # output partials written as full (8, 128) slabs (lane/sublane aligned)


def _round_up(a, b):
    return -(-a // b) * b


def _sublane_mult(dt):
    # native sublane tile multiple per dtype width (f32:8, bf16:16, int8:32)
    return {1: 32, 2: 16}.get(jnp.dtype(dt).itemsize, 8)


def _int_pow(v, k):
    """v**k for a static non-negative integer k via repeated VPU multiplies."""
    assert k >= 0
    if k == 0:
        return jnp.ones_like(v)
    result = None
    cur = v
    while k:
        if k & 1:
            result = cur if result is None else result * cur
        k >>= 1
        if k:
            cur = cur * cur
    return result


def _asl_kernel(x_ref, y_ref, out_ref, acc_ref, *,
                gamma_neg, gamma_pos, clip, eps,
                total_rows, tile_rows, steps_per_core):
    p = pl.program_id(0)   # parallel slice (megacore on v7x; serial elsewhere)
    i = pl.program_id(1)   # reduction step

    @pl.when(i == 0)
    def _():
        acc_ref[...] = jnp.zeros_like(acc_ref)

    x = x_ref[...].astype(jnp.float32)      # in-register upcast (bf16 path saves HBM bytes)
    is_pos = y_ref[...] > 0                 # binarized targets; no f32 cast of y

    # sigmoid as tanh: a single EUP push instead of exp + reciprocal
    xs_pos = 0.5 * jnp.tanh(0.5 * x) + 0.5
    xs_neg_raw = 1.0 - xs_pos
    if clip is not None and clip > 0:
        xs_neg = jnp.minimum(xs_neg_raw + clip, 1.0)   # asymmetric probability shifting
    else:
        xs_neg = xs_neg_raw

    # BCE with one log: y*log(p) + (1-y)*log(q) == log(select) for binary y
    prob = jnp.where(is_pos, xs_pos, xs_neg)
    loss = jnp.log(jnp.maximum(prob, eps))

    # asymmetric focusing
    if gamma_neg > 0 or gamma_pos > 0:
        # base == 1 - xs_pos*y - xs_neg*(1-y) for binary y
        base = jnp.where(is_pos, xs_neg_raw, 1.0 - xs_neg)
        if float(gamma_pos).is_integer() and float(gamma_neg).is_integer():
            # integer gammas -> repeated VPU multiplies (no EUP; matches torch.pow(0,0)=1)
            w = jnp.where(is_pos,
                          _int_pow(base, int(gamma_pos)),
                          _int_pow(base, int(gamma_neg)))
        else:
            expo = jnp.where(is_pos, jnp.float32(gamma_pos), jnp.float32(gamma_neg))
            w = jnp.exp(expo * jnp.log(jnp.maximum(base, 1e-30)))
        loss = loss * w

    def _accumulate(v):
        # Fold the block to (8, C) with pure VPU adds (leading-axis sum: no XLU), then add
        # into the tiny resident accumulator (1 acc load + 1 acc store per step).
        if tile_rows % 8 == 0:
            v = jnp.sum(v.reshape(-1, 8, v.shape[-1]), axis=0)
        acc_ref[...] += v

    row0 = (p * steps_per_core + i) * tile_rows   # row-level index: no int32 overflow

    @pl.when(row0 + tile_rows <= total_rows)      # hot path: interior blocks, no masking
    def _():
        _accumulate(loss)

    @pl.when(row0 + tile_rows > total_rows)       # only the ragged/OOB tail block pays for this
    def _():
        ridx = jax.lax.broadcasted_iota(jnp.int32, loss.shape, 0)
        _accumulate(jnp.where(row0 + ridx < total_rows, loss, 0.0))

    @pl.when(i == pl.num_programs(1) - 1)
    def _():
        # single cross-lane reduce + negate, once per parallel slice
        out_ref[...] = jnp.full((_OUT_SUBLANES, _LANES), -jnp.sum(acc_ref[...]),
                                dtype=jnp.float32)


def _default_num_parallel():
    try:
        kind = jax.devices()[0].device_kind.lower()
        return 2 if "v7" in kind else 1   # 2 TensorCores only on v7x; serial loop elsewhere
    except Exception:
        return 1


def asymmetric_loss(x, y, *, gamma_neg=4, gamma_pos=1, clip=0.05, eps=1e-8,
                    block_rows=None, num_parallel=None):
    """Returns scalar -sum(loss), matching AsymmetricLossOptimized.forward.

    x: logits (f32 or bf16 -- bf16 is kept bf16 in HBM and upcast in-register).
    y: *binarized* multi-label targets (int8 / bf16 / f32). Soft targets are not supported.
    """
    assert x.shape == y.shape
    if num_parallel is None:
        num_parallel = _default_num_parallel()

    # Natural (rows, C) layout: free reshape of contiguous leading dims, no pad, no extra HBM pass.
    if x.ndim >= 2:
        C = x.shape[-1]
        x2 = x.reshape(-1, C)
        y2 = y.reshape(-1, C)
    else:
        x2 = x.reshape(1, -1)
        y2 = y.reshape(1, -1)
        C = x2.shape[-1]
    # NOTE: for very small C (<< 128) a lane-dense flattened layout would use lanes better.
    R = x2.shape[0]
    c_pad = _round_up(C, _LANES)

    # Row tile multiple: keep int8/bf16 blocks on their native sublane tile.
    m = max(_sublane_mult(x.dtype), _sublane_mult(y.dtype))

    # Row tile sized for ~4 MiB f32 logit blocks (past the pipeline-efficiency knee, and
    # double-buffered inputs still fit comfortably in v7x's 64 MiB VMEM).
    if block_rows is None:
        block_rows = (4 << 20) // (4 * c_pad)
    block_rows = max(m, (int(block_rows) // m) * m)

    if R <= block_rows:
        tile_rows = R               # block = full dim: always legal, mask branch never taken
        num_parallel = 1
        steps_per_core = 1
        blocks_total = 1
    else:
        tile_rows = block_rows      # multiple of m >= 8
        blocks_total = -(-R // tile_rows)
        num_parallel = max(1, min(num_parallel, blocks_total))
        steps_per_core = -(-blocks_total // num_parallel)

    acc_rows = _OUT_SUBLANES if tile_rows % 8 == 0 else tile_rows

    kernel = functools.partial(
        _asl_kernel, gamma_neg=gamma_neg, gamma_pos=gamma_pos, clip=clip, eps=eps,
        total_rows=R, tile_rows=tile_rows, steps_per_core=steps_per_core)

    # Clamp to the last real block so fully-OOB grid steps re-read valid memory; the in-kernel
    # row mask (computed from the unclamped index) zeroes their contribution.
    last_block = blocks_total - 1
    in_map = lambda p, i: (jnp.minimum(p * steps_per_core + i, last_block), 0)

    # Explicit VMEM budget: double-buffered inputs + accumulator + slack.
    x_blk = tile_rows * c_pad * jnp.dtype(x.dtype).itemsize
    y_blk = tile_rows * c_pad * jnp.dtype(y.dtype).itemsize
    vmem_limit = 2 * (x_blk + y_blk) + _round_up(acc_rows, 8) * c_pad * 4 + (2 << 20)
    vmem_limit = int(min(max(vmem_limit, 16 << 20), 64 << 20))

    out = pl.pallas_call(
        kernel,
        out_shape=jax.ShapeDtypeStruct((num_parallel * _OUT_SUBLANES, _LANES), jnp.float32),
        grid_spec=pltpu.PrefetchScalarGridSpec(
            num_scalar_prefetch=0,
            grid=(num_parallel, steps_per_core),
            in_specs=[
                pl.BlockSpec((tile_rows, C), in_map),
                pl.BlockSpec((tile_rows, C), in_map),
            ],
            out_specs=pl.BlockSpec((_OUT_SUBLANES, _LANES), lambda p, i: (p, 0)),
            scratch_shapes=[pltpu.VMEM((acc_rows, C), jnp.float32)],
        ),
        compiler_params=pltpu.CompilerParams(
            dimension_semantics=("parallel", "arbitrary"),
            vmem_limit_bytes=vmem_limit),
    )(x2, y2)

    # One partial (replicated over its (8,128) slab) per parallel slice; combine them.
    return jnp.sum(out[::_OUT_SUBLANES, 0])


def _reference(x, y, gamma_neg=4, gamma_pos=1, clip=0.05, eps=1e-8):
    # Pure-JAX reference mirroring the PyTorch forward.
    x = x.astype(jnp.float32)
    y = y.astype(jnp.float32)
    anti = 1.0 - y
    xs_pos = jax.nn.sigmoid(x)
    xs_neg = 1.0 - xs_pos
    if clip is not None and clip > 0:
        xs_neg = jnp.minimum(xs_neg + clip, 1.0)
    loss = y * jnp.log(jnp.maximum(xs_pos, eps))
    loss = loss + anti * jnp.log(jnp.maximum(xs_neg, eps))
    if gamma_neg > 0 or gamma_pos > 0:
        base = 1.0 - xs_pos * y - xs_neg * anti
        expo = gamma_pos * y + gamma_neg * anti
        loss = loss * jnp.power(base, expo)
    return -jnp.sum(loss)


if __name__ == "__main__":
    key = jax.random.PRNGKey(0)
    k1, k2, k3, k4, k5, k6 = jax.random.split(key, 6)

    # Test 1: typical multi-label batch, f32 logits + f32 binarized targets, single block.
    B, Ccls = 8, 80
    x = jax.random.normal(k1, (B, Ccls), dtype=jnp.float32)
    y = (jax.random.uniform(k2, (B, Ccls)) > 0.7).astype(jnp.float32)
    out = jax.block_until_ready(asymmetric_loss(x, y))
    ref = _reference(x, y)
    assert jnp.allclose(out, ref, rtol=1e-4, atol=1e-2), (out, ref)

    # Test 2: ragged row count, non-128-aligned classes, int8 targets, forced multi-block grid
    # with 2 slices (exercises init/accumulate/finalize, pl.when tail masking, block clamping).
    B2, C2 = 37, 200
    x2 = jax.random.normal(k3, (B2, C2), dtype=jnp.float32)
    y2 = (jax.random.uniform(k4, (B2, C2)) > 0.7).astype(jnp.int8)
    out2 = jax.block_until_ready(asymmetric_loss(x2, y2, block_rows=32, num_parallel=2))
    ref2 = _reference(x2, y2.astype(jnp.float32))
    assert jnp.allclose(out2, ref2, rtol=1e-4, atol=1e-2), (out2, ref2)

    # Test 3: bf16 logits fast path (no wrapper cast; HBM byte saving), f32 targets.
    B3, C3 = 16, 64
    x3 = jax.random.normal(k5, (B3, C3), dtype=jnp.float32).astype(jnp.bfloat16)
    y3 = (jax.random.uniform(k6, (B3, C3)) > 0.7).astype(jnp.float32)
    out3 = jax.block_until_ready(asymmetric_loss(x3, y3))
    ref3 = _reference(x3.astype(jnp.float32), y3)
    assert jnp.allclose(out3, ref3, rtol=1e-4, atol=1e-2), (out3, ref3)

    print("KERNEL_OK")
</pallas_src>

<mosaic_0001>
module attributes {stable_mosaic.version = 11 : i64} {
  func.func @_asl_kernel(%arg0: i32, %arg1: i32, %arg2: memref<8x80xf32, #tpu.memory_space<vmem>>, %arg3: memref<8x80xf32, #tpu.memory_space<vmem>>, %arg4: memref<8x128xf32, #tpu.memory_space<vmem>>, %arg5: memref<8x80xf32, #tpu.memory_space<vmem>>) attributes {dimension_semantics = [#tpu.dimension_semantics<parallel>, #tpu.dimension_semantics<arbitrary>], iteration_bounds = array<i64: 1, 1>, scalar_prefetch = 0 : i64, scratch_operands = 1 : i64, tpu.core_type = #tpu.core_type<tc>, window_params = [{transform_indices = @transform_0, window_bounds = array<i64: 8, 80>}, {transform_indices = @transform_1, window_bounds = array<i64: 8, 80>}, {transform_indices = @transform_2, window_bounds = array<i64: 8, 128>}]} {
    %c0_i32 = arith.constant 0 : i32
    %0 = arith.cmpi eq, %arg1, %c0_i32 : i32
    %1 = arith.extui %0 : i1 to i32
    %c0_i32_0 = arith.constant 0 : i32
    %2 = arith.cmpi ne, %1, %c0_i32_0 : i32
    scf.if %2 {
      %cst_20 = arith.constant 0.000000e+00 : f32
      %45 = vector.broadcast %cst_20 : f32 to vector<8x80xf32>
      %c0_21 = arith.constant 0 : index
      %c0_22 = arith.constant 0 : index
      %46 = vector.load %arg5[%c0_21, %c0_22] : memref<8x80xf32, #tpu.memory_space<vmem>>, vector<8x80xf32>
      tpu.vector_store %arg5[%c0_21, %c0_22], %45 {strides = array<i32>} : memref<8x80xf32, #tpu.memory_space<vmem>>, vector<8x80xf32>,
    } else {
    }
    %c0 = arith.constant 0 : index
    %c0_1 = arith.constant 0 : index
    %3 = vector.load %arg2[%c0, %c0_1] : memref<8x80xf32, #tpu.memory_space<vmem>>, vector<8x80xf32>
    %c0_2 = arith.constant 0 : index
    %c0_3 = arith.constant 0 : index
    %4 = vector.load %arg3[%c0_2, %c0_3] : memref<8x80xf32, #tpu.memory_space<vmem>>, vector<8x80xf32>
    %cst = arith.constant 0.000000e+00 : f32
    %5 = vector.broadcast %cst : f32 to vector<8x80xf32>
    %6 = arith.cmpf ogt, %4, %5 : vector<8x80xf32>
    %cst_4 = arith.constant 5.000000e-01 : f32
    %7 = vector.broadcast %cst_4 : f32 to vector<8x80xf32>
    %8 = arith.mulf %7, %3 : vector<8x80xf32>
    %9 = math.tanh %8 : vector<8x80xf32>
    %cst_5 = arith.constant 5.000000e-01 : f32
    %10 = vector.broadcast %cst_5 : f32 to vector<8x80xf32>
    %11 = arith.mulf %10, %9 : vector<8x80xf32>
    %cst_6 = arith.constant 5.000000e-01 : f32
    %12 = vector.broadcast %cst_6 : f32 to vector<8x80xf32>
    %13 = arith.addf %11, %12 : vector<8x80xf32>
    %cst_7 = arith.constant 1.000000e+00 : f32
    %14 = vector.broadcast %cst_7 : f32 to vector<8x80xf32>
    %15 = arith.subf %14, %13 : vector<8x80xf32>
    %cst_8 = arith.constant 5.000000e-02 : f32
    %16 = vector.broadcast %cst_8 : f32 to vector<8x80xf32>
    %17 = arith.addf %15, %16 : vector<8x80xf32>
    %cst_9 = arith.constant 1.000000e+00 : f32
    %18 = vector.broadcast %cst_9 : f32 to vector<8x80xf32>
    %19 = arith.minimumf %17, %18 : vector<8x80xf32>
    %20 = arith.select %6, %13, %19 : vector<8x80xi1>, vector<8x80xf32>
    %cst_10 = arith.constant 9.99999993E-9 : f32
    %21 = vector.broadcast %cst_10 : f32 to vector<8x80xf32>
    %22 = arith.maximumf %20, %21 : vector<8x80xf32>
    %23 = math.log %22 : vector<8x80xf32>
    %cst_11 = arith.constant 1.000000e+00 : f32
    %24 = vector.broadcast %cst_11 : f32 to vector<8x80xf32>
    %25 = arith.subf %24, %19 : vector<8x80xf32>
    %26 = arith.select %6, %15, %25 : vector<8x80xi1>, vector<8x80xf32>
    %27 = arith.mulf %26, %26 : vector<8x80xf32>
    %28 = arith.mulf %27, %27 : vector<8x80xf32>
    %29 = arith.select %6, %26, %28 : vector<8x80xi1>, vector<8x80xf32>
    %30 = arith.mulf %23, %29 : vector<8x80xf32>
    %c1_i32 = arith.constant 1 : i32
    %31 = arith.muli %arg0, %c1_i32 : i32
    %32 = arith.addi %31, %arg1 : i32
    %c8_i32 = arith.constant 8 : i32
    %33 = arith.muli %32, %c8_i32 : i32
    %c8_i32_12 = arith.constant 8 : i32
    %34 = arith.addi %33, %c8_i32_12 : i32
    %c8_i32_13 = arith.constant 8 : i32
    %35 = arith.cmpi sle, %34, %c8_i32_13 : i32
    %36 = arith.extui %35 : i1 to i32
    %c0_i32_14 = arith.constant 0 : i32
    %37 = arith.cmpi ne, %36, %c0_i32_14 : i32
    scf.if %37 {
      %45 = vector.shape_cast %30 : vector<8x80xf32> to vector<1x8x80xf32>
      %cst_20 = arith.constant dense<0.000000e+00> : vector<8x80xf32>
      %46 = vector.multi_reduction <add>, %45, %cst_20 [0] : vector<1x8x80xf32> to vector<8x80xf32>
      %c0_21 = arith.constant 0 : index
      %c0_22 = arith.constant 0 : index
      %47 = vector.load %arg5[%c0_21, %c0_22] : memref<8x80xf32, #tpu.memory_space<vmem>>, vector<8x80xf32>
      %48 = arith.addf %47, %46 : vector<8x80xf32>
      %c0_23 = arith.constant 0 : index
      %c0_24 = arith.constant 0 : index
      %49 = vector.load %arg5[%c0_23, %c0_24] : memref<8x80xf32, #tpu.memory_space<vmem>>, vector<8x80xf32>
      tpu.vector_store %arg5[%c0_23, %c0_24], %48 {strides = array<i32>} : memref<8x80xf32, #tpu.memory_space<vmem>>, vector<8x80xf32>,
    } else {
    }
    %c8_i32_15 = arith.constant 8 : i32
    %38 = arith.addi %33, %c8_i32_15 : i32
    %c8_i32_16 = arith.constant 8 : i32
    %39 = arith.cmpi sgt, %38, %c8_i32_16 : i32
    %40 = arith.extui %39 : i1 to i32
    %c0_i32_17 = arith.constant 0 : i32
    %41 = arith.cmpi ne, %40, %c0_i32_17 : i32
    scf.if %41 {
      %45 = tpu.iota {dimensions = array<i32: 0>} : vector<8x80xi32>
      %46 = vector.broadcast %33 : i32 to vector<8x80xi32>
      %47 = arith.addi %46, %45 : vector<8x80xi32>
      %c8_i32_20 = arith.constant 8 : i32
      %48 = vector.broadcast %c8_i32_20 : i32 to vector<8x80xi32>
      %49 = arith.cmpi slt, %47, %48 : vector<8x80xi32>
      %cst_21 = arith.constant 0.000000e+00 : f32
      %50 = vector.broadcast %cst_21 : f32 to vector<8x80xf32>
      %51 = arith.select %49, %30, %50 : vector<8x80xi1>, vector<8x80xf32>
      %52 = vector.shape_cast %51 : vector<8x80xf32> to vector<1x8x80xf32>
      %cst_22 = arith.constant dense<0.000000e+00> : vector<8x80xf32>
      %53 = vector.multi_reduction <add>, %52, %cst_22 [0] : vector<1x8x80xf32> to vector<8x80xf32>
      %c0_23 = arith.constant 0 : index
      %c0_24 = arith.constant 0 : index
      %54 = vector.load %arg5[%c0_23, %c0_24] : memref<8x80xf32, #tpu.memory_space<vmem>>, vector<8x80xf32>
      %55 = arith.addf %54, %53 : vector<8x80xf32>
      %c0_25 = arith.constant 0 : index
      %c0_26 = arith.constant 0 : index
      %56 = vector.load %arg5[%c0_25, %c0_26] : memref<8x80xf32, #tpu.memory_space<vmem>>, vector<8x80xf32>
      tpu.vector_store %arg5[%c0_25, %c0_26], %55 {strides = array<i32>} : memref<8x80xf32, #tpu.memory_space<vmem>>, vector<8x80xf32>,
    } else {
    }
    %c0_i32_18 = arith.constant 0 : i32
    %42 = arith.cmpi eq, %arg1, %c0_i32_18 : i32
    %43 = arith.extui %42 : i1 to i32
    %c0_i32_19 = arith.constant 0 : i32
    %44 = arith.cmpi ne, %43, %c0_i32_19 : i32
    scf.if %44 {
      %c0_20 = arith.constant 0 : index
      %c0_21 = arith.constant 0 : index
      %45 = vector.load %arg5[%c0_20, %c0_21] : memref<8x80xf32, #tpu.memory_space<vmem>>, vector<8x80xf32>
      %46 = vector.shape_cast %45 : vector<8x80xf32> to vector<1x8x80xf32>
      %cst_22 = arith.constant dense<0.000000e+00> : vector<1xf32>
      %47 = vector.multi_reduction <add>, %46, %cst_22 [1, 2] : vector<1x8x80xf32> to vector<1xf32>
      %48 = vector.shape_cast %47 : vector<1xf32> to vector<1x1x1xf32>
      %49 = vector.extract %48[0, 0, 0] : f32 from vector<1x1x1xf32>
      %cst_23 = arith.constant 0.000000e+00 : f32
      %50 = arith.subf %cst_23, %49 : f32
      %51 = vector.broadcast %50 : f32 to vector<8x128xf32>
      %c0_24 = arith.constant 0 : index
      %c0_25 = arith.constant 0 : index
      %52 = vector.load %arg4[%c0_24, %c0_25] : memref<8x128xf32, #tpu.memory_space<vmem>>, vector<8x128xf32>
      tpu.vector_store %arg4[%c0_24, %c0_25], %51 {strides = array<i32>} : memref<8x128xf32, #tpu.memory_space<vmem>>, vector<8x128xf32>,
    } else {
    }
    return
  }
  func.func @transform_0(%arg0: i32, %arg1: i32) -> (i32, i32) {
    %c1_i32 = arith.constant 1 : i32
    %0 = arith.muli %arg0, %c1_i32 : i32
    %1 = arith.addi %0, %arg1 : i32
    %c0_i32 = arith.constant 0 : i32
    %2 = arith.minsi %1, %c0_i32 : i32
    %c0_i32_0 = arith.constant 0 : i32
    %c0_i32_1 = arith.constant 0 : i32
    return %2, %c0_i32_0 : i32, i32
  }
  func.func @transform_1(%arg0: i32, %arg1: i32) -> (i32, i32) {
    %c1_i32 = arith.constant 1 : i32
    %0 = arith.muli %arg0, %c1_i32 : i32
    %1 = arith.addi %0, %arg1 : i32
    %c0_i32 = arith.constant 0 : i32
    %2 = arith.minsi %1, %c0_i32 : i32
    %c0_i32_0 = arith.constant 0 : i32
    %c0_i32_1 = arith.constant 0 : i32
    return %2, %c0_i32_0 : i32, i32
  }
  func.func @transform_2(%arg0: i32, %arg1: i32) -> (i32, i32) {
    %c0_i32 = arith.constant 0 : i32
    %c0_i32_0 = arith.constant 0 : i32
    return %arg0, %c0_i32 : i32, i32
  }
}

</mosaic_0001>

<llo_original>
// kernel: tpu_custom_call.1
$region0: #{tpu_custom_call.1}
  #allocation0 [shape = 'u32[]', space=smem, size = 0x4, offset = 0x4, fixed_abs, tag = 'smem constant byte address 0x4 - core index']
  #allocation1 [shape = 'u32[72,128]{1,0:T(1,128)}', space=vmem, size = 0x9000, scoped, tag = 'internal scratch']
  #allocation2 [shape = 'f32[8,80]{1,0:T(8,128)}', space=vmem, size = 0x1000, scoped, tag = 'scratch operand']
  %s0 = inlined_call_operand.hbm [shape: f32[8,80], index: 0, kind: input, shape index: {}]
  %s1 = inlined_call_operand.hbm [shape: f32[8,80], index: 1, kind: input, shape index: {}]
  %s2 = inlined_call_operand.hbm [shape: f32[8,128], index: 2, kind: output, shape index: {}]
  %s3 = sld [smem:[#allocation0]]
  $region42: #{tpu_custom_call.1} parent=0
    _
  %s5 = ssub.s32 1, %s3
  %s6 = scalar_select 0, %s5, %s3
  $region1: #{tpu_custom_call.1} parent=0
    #allocation3 [shape = 'u8[4096]{0}', space=vmem, size = 0x1000, scoped, tag = 'input window, operand 0, single buffered']
    #allocation4 [shape = 's32[1]{0}', space=sflag, size = 0x4, scoped, tag = 'scoped memory for tpu_custom_call.1']
    #allocation5 [shape = 's32[1]{0}', space=sflag, size = 0x4, scoped, tag = 'scoped memory for tpu_custom_call.1']
    #allocation6 [shape = 'u8[4096]{0}', space=vmem, size = 0x1000, scoped, tag = 'input window, operand 1, single buffered']
    #allocation7 [shape = 's32[1]{0}', space=sflag, size = 0x4, scoped, tag = 'scoped memory for tpu_custom_call.1']
    #allocation8 [shape = 'u8[4096]{0}', space=vmem, size = 0x1000, scoped, tag = 'output window, operand 0, single buffered']
    %7 = vsyncpa [#allocation4], 0
    %8 = vsyncpa [#allocation7], 0
    %9 = vsyncpa [#allocation5], 0
    // Predicated region
    $region2: #{tpu_custom_call.1} parent=1 // pred_check
      _
    $region3: #{tpu_custom_call.1} parent=1 // pred_check_branch
      %11 = sbr.rel (0) target = $region5
    $region4: #{tpu_custom_call.1} parent=1 // pred_region
      %s12 = sadd.s32 0, 0
      %p13 = scmp.lt.s32.totalorder %s12, 0
      %s14 = scalar_select %p13, %s12, 0
      %16 = vsyncadd [#allocation4], 0
      %s17 = smul.addr %s14, 8
      %s18 = scalar_lea.hbm %s0, %s17
      %s20 = sshll.u32 %s18, 4
      %s21 = int_to_ptr.hbm [resolvable:$true] %s20
      %s22 = sshll.u32 [#allocation3], 4
      %s23 = int_to_ptr.vmem [resolvable:$true] %s22
      %25 = dma.hbm_to_vmem [thread:$0]  %s21, 128, %s23, [#allocation4]
    $region5: #{tpu_custom_call.1} parent=1 // pred_fallthru
      _
    // Predicated region
    $region6: #{tpu_custom_call.1} parent=1 // pred_check
      _
    $region7: #{tpu_custom_call.1} parent=1 // pred_check_branch
      %27 = sbr.rel (0) target = $region9
    $region8: #{tpu_custom_call.1} parent=1 // pred_region
      %s28 = sadd.s32 0, 0
      %p29 = scmp.lt.s32.totalorder %s28, 0
      %s30 = scalar_select %p29, %s28, 0
      %32 = vsyncadd [#allocation7], 0
      %s33 = smul.addr %s30, 8
      %s34 = scalar_lea.hbm %s1, %s33
      %s36 = sshll.u32 %s34, 4
      %s37 = int_to_ptr.hbm [resolvable:$true] %s36
      %s38 = sshll.u32 [#allocation6], 4
      %s39 = int_to_ptr.vmem [resolvable:$true] %s38
      %41 = dma.hbm_to_vmem [thread:$0]  %s37, 128, %s39, [#allocation7]
    $region9: #{tpu_custom_call.1} parent=1 // pred_fallthru
      _
    // Predicated region
    $region10: #{tpu_custom_call.1} parent=1 // pred_check
      _
    $region11: #{tpu_custom_call.1} parent=1 // pred_check_branch
      %43 = sbr.rel (0) target = $region13
    $region12: #{tpu_custom_call.1} parent=1 // pred_region
      %45 = dma.done [#allocation4], 128
    $region13: #{tpu_custom_call.1} parent=1 // pred_fallthru
      _
    // Predicated region
    $region14: #{tpu_custom_call.1} parent=1 // pred_check
      _
    $region15: #{tpu_custom_call.1} parent=1 // pred_check_branch
      %47 = sbr.rel (0) target = $region17
    $region16: #{tpu_custom_call.1} parent=1 // pred_region
      %49 = dma.done [#allocation7], 128
    $region17: #{tpu_custom_call.1} parent=1 // pred_fallthru
      _
    %s50 = sadd.s32 0, 0
    %p51 = scmp.lt.s32.totalorder %s50, 0
    %s52 = scalar_select %p51, %s50, 0
    %s53 = sadd.s32 0, 0
    %p54 = scmp.lt.s32.totalorder %s53, 0
    %s55 = scalar_select %p54, %s53, 0
    %p56 = scmp.eq.s32.totalorder 0, 0
    // Predicated region
    $region18: #{tpu_custom_call.1} parent=1 // pred_check
      %p57 = pneg %p56
    $region19: #{tpu_custom_call.1} parent=1 // pred_check_branch
      %59 = sbr.rel (%p57) target = $region21
    $region20: #{tpu_custom_call.1} parent=1 // pred_region
      %vm60 = vcmask 654336
      %61 = vst.msk [vmem:[#allocation2] sm:$0xff] %vm60, 0.0
    $region21: #{tpu_custom_call.1} parent=1 // pred_fallthru
      _
    %v62 = vld [vmem:[#allocation3] sm:$0xff]
    %v63 = vld [vmem:[#allocation6] sm:$0xff]
    %vm64 = vcmp.gt.f32.partialorder %v63, 0.0
    %v65 = vmul.f32 %v62, 0.5
    %v66 = vtanh.pop %v65
    %v67 = vmul.f32 %v66, 0.5
    %v68 = vadd.f32 %v67, 0.5
    %v69 = vsub.f32 1.0, %v68
    %v70 = vadd.f32 %v69, 0.05
    %v71 = vmin.f32 %v70, 1.0
    %v72 = vsel %vm64, %v68, %v71
    %v73 = vmax.f32 %v72, 1e-08
    %v74 = vlog2.pop %v73
    %v75 = vmul.f32 %v74, 0.6931472
    %v76 = vsub.f32 1.0, %v71
    %v77 = vsel %vm64, %v69, %v76
    %v78 = vmul.f32 %v77, %v77
    %v79 = vmul.f32 %v78, %v78
    %v80 = vsel %vm64, %v69, %v79
    %v81 = vmul.f32 %v75, %v80
    %s82 = sadd.s32 0, 0
    %s83 = smul.u32 %s82, 8
    %s84 = sadd.s32 %s83, 8
    %p85 = scmp.le.s32.totalorder %s84, 8
    // Predicated region
    $region22: #{tpu_custom_call.1} parent=1 // pred_check
      %p86 = pneg %p85
    $region23: #{tpu_custom_call.1} parent=1 // pred_check_branch
      %88 = sbr.rel (%p86) target = $region25
    $region24: #{tpu_custom_call.1} parent=1 // pred_region
      %v89 = vadd.f32 %v81, 0.0
      %v90 = vld [vmem:[#allocation2] sm:$0xff]
      %v91 = vadd.f32 %v90, %v89
      %vm92 = vcmask 654336
      %93 = vst.msk [vmem:[#allocation2] sm:$0xff] %vm92, %v91
    $region25: #{tpu_custom_call.1} parent=1 // pred_fallthru
      _
    %p94 = scmp.gt.s32.totalorder %s84, 8
    // Predicated region
    $region26: #{tpu_custom_call.1} parent=1 // pred_check
      %p95 = pneg %p94
    $region27: #{tpu_custom_call.1} parent=1 // pred_check_branch
      %97 = sbr.rel (%p95) target = $region29
    $region28: #{tpu_custom_call.1} parent=1 // pred_region
      %v98 = vlaneseq
      %v99 = vshrl.u32 %v98, 7
      %v100 = vstv %s83
      %v101 = vadd.s32 %v100, %v99
      %vm102 = vcmp.lt.s32.totalorder %v101, 8
      %v103 = vsel %vm102, %v81, 0.0
      %v104 = vadd.f32 %v103, 0.0
      %v105 = vld [vmem:[#allocation2] sm:$0xff]
      %v106 = vadd.f32 %v105, %v104
      %vm107 = vcmask 654336
      %108 = vst.msk [vmem:[#allocation2] sm:$0xff] %vm107, %v106
    $region29: #{tpu_custom_call.1} parent=1 // pred_fallthru
      _
    // Predicated region
    $region30: #{tpu_custom_call.1} parent=1 // pred_check
      %p109 = pneg %p56
    $region31: #{tpu_custom_call.1} parent=1 // pred_check_branch
      %111 = sbr.rel (%p109) target = $region33
    $region32: #{tpu_custom_call.1} parent=1 // pred_region
      %v112 = vld [vmem:[#allocation2] sm:$0xff]
      %vm113 = vcmask 654336
      %v114 = vsel %vm113, %v112, 0.0
      %115 = vadd.xlane.f32.xlu0 %v114
      %v116 = vpop.xlane.xlu0 %115
      %v117 = vrot.slane %v116, 4
      %v118 = vadd.f32 %v116, %v117
      %v119 = vrot.slane %v118, 2
      %v120 = vadd.f32 %v118, %v119
      %v121 = vrot.slane %v120, 1
      %v122 = vadd.f32 %v120, %v121
      %s123 = vtos %v122
      %s124 = ssub.f32 0.0, %s123
      %v125 = vstv %s124
      %126 = vst [vmem:[#allocation8] sm:$0xff] %v125
    $region33: #{tpu_custom_call.1} parent=1 // pred_fallthru
      _
    // Predicated region
    $region34: #{tpu_custom_call.1} parent=1 // pred_check
      _
    $region35: #{tpu_custom_call.1} parent=1 // pred_check_branch
      %128 = sbr.rel (0) target = $region37
    $region36: #{tpu_custom_call.1} parent=1 // pred_region
      %130 = vsyncadd [#allocation5], 0
      %s132 = sshll.u32 [#allocation8], 4
      %s133 = int_to_ptr.vmem [resolvable:$true] %s132
      %s134 = sshll.u32 %s2, 4
      %s135 = int_to_ptr.hbm [resolvable:$true] %s134
      %137 = dma.vmem_to_hbm [thread:$0]  %s133, 128, %s135, [#allocation5]
    $region37: #{tpu_custom_call.1} parent=1 // pred_fallthru
      _
    // Predicated region
    $region38: #{tpu_custom_call.1} parent=1 // pred_check
      _
    $region39: #{tpu_custom_call.1} parent=1 // pred_check_branch
      %139 = sbr.rel (0) target = $region41
    $region40: #{tpu_custom_call.1} parent=1 // pred_region
      %141 = dma.done [#allocation5], 128
    $region41: #{tpu_custom_call.1} parent=1 // pred_fallthru
      _
    %142 = vsyncpa [#allocation4], 1
    %143 = vsyncpa [#allocation7], 1
    %144 = vsyncpa [#allocation5], 1

</llo_original>
